<compile_context>
chip_gen: v5e
topology: v5e:2x2
jax: 0.10.0
libtpu: 0.0.40
codegen_flags: <defaults>
</compile_context>

<pallas_src>
import functools

import jax
import jax.numpy as jnp
import numpy as np
from jax.experimental import pallas as pl
from jax.experimental.pallas import tpu as pltpu


# ----------------------------- Pallas kernel --------------------------------
def _rel_attn_agg_kernel(head_ref, nb_ref, relemb_ref, w_ref,
                         relations_ref, tos_ref, out_ref, *, d_r):
    head = head_ref[...]            # (1, D_e)
    nb = nb_ref[...]                # (n_nodes, D_e)
    rel_flat = relemb_ref[...]      # (1, n_rel*D_r)
    w_flat = w_ref[...]             # (D_e, n_rel*D_r)
    relations = relations_ref[...]  # (E, 1) int32
    tos = tos_ref[...]              # (E, 1) int32

    E = relations.shape[0]
    n_nodes = nb.shape[0]
    L = w_flat.shape[1]             # n_rel * D_r

    # ---- in-kernel gather: tails[e] = nb_embeddings[tos[e]] --------------
    # One-hot selection as a (E, n_nodes) x (n_nodes, D_e) MXU matmul; exact
    # for f32 and avoids any HBM gather.
    # TODO(synk): for large node tables, switch to scalar-prefetched `tos`
    # with a per-row DMA gather instead of the one-hot matmul.
    node_iota = jax.lax.broadcasted_iota(jnp.int32, (E, n_nodes), 1)
    onehot_tos = (node_iota == tos).astype(jnp.float32)                    # (E, n_nodes)
    tails = jnp.dot(onehot_tos, nb, preferred_element_type=jnp.float32)    # (E, D_e)

    # ---- projections: two lane-dense 2D MXU matmuls against the table ----
    # hp[0, k*D_r + r] = head @ relation_matrices[k, :, r]
    hp = jnp.dot(head, w_flat, preferred_element_type=jnp.float32)         # (1, L)
    # tp[e, k*D_r + r] = tails[e] @ relation_matrices[k, :, r]
    # (computes all relation hypotheses in one matmul; per-edge relation is
    #  selected below with a lane mask -- cheap while n_relations is modest)
    tp = jnp.dot(tails, w_flat, preferred_element_type=jnp.float32)        # (E, L)
    tv = jnp.tanh(tp + rel_flat)                                           # (E, L)  (EUP)

    # ---- per-edge relation selection via a lane mask, lane-reduce to scores
    lane = jax.lax.broadcasted_iota(jnp.int32, (E, L), 1)
    lo = relations * d_r                                                   # (E, 1)
    sel = (lane >= lo) & (lane < lo + d_r)                                 # (E, L)
    scores = jnp.sum(jnp.where(sel, hp * tv, 0.0),
                     axis=1, keepdims=True)                                # (E, 1)

    # ---- softmax over edges (2D keepdims throughout) ----------------------
    m = jnp.max(scores, axis=0, keepdims=True)                             # (1, 1)
    p = jnp.exp(scores - m)                                                # (E, 1)
    sum_p = jnp.sum(p, axis=0, keepdims=True)                              # (1, 1)

    # ---- weighted sum of tails; normalization folded into the (1, D_e) result
    weighted = jnp.sum(tails * p, axis=0, keepdims=True)                   # (1, D_e)
    # (use approx=True here if ~1e-3 relative error in the softmax scale is OK)
    out_ref[...] = (weighted * pl.reciprocal(sum_p)).astype(out_ref.dtype)


def relation_attentive_aggregate(head_2d, nb_emb, rel_flat, w_flat,
                                 relations_2d, tos_2d, d_r):
    """All operands already in the lane-dense layouts documented above."""
    D_e = head_2d.shape[1]
    kernel = functools.partial(_rel_attn_agg_kernel, d_r=d_r)
    # Small problem: all tables fit in VMEM, single grid-less invocation.
    # TODO(synk): when aggregating many head nodes, add a ('parallel',) grid
    # over heads so the work is pipelined and sharded across TensorCores.
    return pl.pallas_call(
        kernel,
        out_shape=jax.ShapeDtypeStruct((1, D_e), jnp.float32),
        in_specs=[
            pl.BlockSpec(memory_space=pltpu.VMEM),  # head
            pl.BlockSpec(memory_space=pltpu.VMEM),  # nb_embeddings table
            pl.BlockSpec(memory_space=pltpu.VMEM),  # relation embedding table
            pl.BlockSpec(memory_space=pltpu.VMEM),  # relation matrices (flat)
            pl.BlockSpec(memory_space=pltpu.VMEM),  # relations (E, 1) int32
            pl.BlockSpec(memory_space=pltpu.VMEM),  # tos       (E, 1) int32
        ],
        out_specs=pl.BlockSpec(memory_space=pltpu.VMEM),
    )(head_2d, nb_emb, rel_flat, w_flat, relations_2d, tos_2d)


# ------------------------------ plain-JAX glue -------------------------------
def forward(head_embedding, relation_embedding_table, relation_matrices,
            nb_embeddings, relations, tos):
    """Mirrors RelationAttentiveAggregator.forward.

    head_embedding            : (D_e,)
    relation_embedding_table  : (n_relations, D_r)   (nn.Embedding weight)
    relation_matrices         : (n_relations, D_e, D_r)
    nb_embeddings             : (n_nodes, D_e)       (neighbor embedding table)
    relations                 : (E,) int32           edge relation types
    tos                       : (E,) int32           edge target node ids
    """
    n_rel, D_e, D_r = relation_matrices.shape
    # Pure layout plumbing (free reshapes/transposes in XLA); no gathers here.
    w_flat = jnp.transpose(relation_matrices, (1, 0, 2)).reshape(D_e, n_rel * D_r)
    rel_flat = relation_embedding_table.reshape(1, n_rel * D_r)
    head_2d = head_embedding.reshape(1, D_e)
    relations_2d = relations.reshape(-1, 1).astype(jnp.int32)
    tos_2d = tos.reshape(-1, 1).astype(jnp.int32)
    out = relation_attentive_aggregate(head_2d, nb_embeddings, rel_flat, w_flat,
                                       relations_2d, tos_2d, D_r)
    return out.reshape(D_e)


def reference(head, tails, rel_emb, W_r):
    head_values = jnp.einsum("d,edr->er", head, W_r)
    tail_values = jnp.tanh(jnp.einsum("ed,edr->er", tails, W_r) + rel_emb)
    scores = jnp.einsum("er,er->e", head_values, tail_values)
    probs = jax.nn.softmax(scores, axis=0)
    return jnp.sum(tails * probs[:, None], axis=0)


# --------------------------------- main --------------------------------------
if __name__ == "__main__":
    # Config-like constants (small, consistent with the module).
    n_relations = 4
    entity_dim = 32        # config.entity_embedding_dim
    relation_dim = 32      # config.relation_embedding_dim
    n_nodes = 16
    n_edges = 8

    key = jax.random.PRNGKey(0)
    k1, k2, k3, k4, k5, k6 = jax.random.split(key, 6)

    # relation_matrices ~ xavier_uniform with gain = calculate_gain('relu') = sqrt(2)
    fan_in = entity_dim * relation_dim
    fan_out = n_relations * relation_dim
    bound = np.sqrt(2.0) * np.sqrt(6.0 / (fan_in + fan_out))
    relation_matrices = jax.random.uniform(
        k1, (n_relations, entity_dim, relation_dim),
        minval=-bound, maxval=bound, dtype=jnp.float32)

    # nn.Embedding weight ~ N(0, 1)
    relation_embedding_table = jax.random.normal(
        k2, (n_relations, relation_dim), dtype=jnp.float32)

    # neighbor embedding table and head embedding
    nb_embeddings = jax.random.normal(k3, (n_nodes, entity_dim), dtype=jnp.float32)
    head_embedding = jax.random.normal(k4, (entity_dim,), dtype=jnp.float32)

    # edges: (relation_type, to)
    relations = jax.random.randint(k5, (n_edges,), 0, n_relations, dtype=jnp.int32)
    tos = jax.random.randint(k6, (n_edges,), 0, n_nodes, dtype=jnp.int32)

    out = forward(head_embedding, relation_embedding_table, relation_matrices,
                  nb_embeddings, relations, tos)
    out = jax.block_until_ready(out)

    # correctness check against pure-JAX reference (XLA-side gathers only here)
    tails = nb_embeddings[tos]
    rel_emb = relation_embedding_table[relations]
    W_r = relation_matrices[relations]
    ref = reference(head_embedding, tails, rel_emb, W_r)
    np.testing.assert_allclose(np.asarray(out), np.asarray(ref),
                               rtol=1e-5, atol=1e-5)

    print("KERNEL_OK")
</pallas_src>

<mosaic_0001>
module attributes {stable_mosaic.version = 11 : i64} {
  func.func @_rel_attn_agg_kernel(%arg0: memref<1x32xf32, #tpu.memory_space<vmem>>, %arg1: memref<16x32xf32, #tpu.memory_space<vmem>>, %arg2: memref<1x128xf32, #tpu.memory_space<vmem>>, %arg3: memref<32x128xf32, #tpu.memory_space<vmem>>, %arg4: memref<8x1xi32, #tpu.memory_space<vmem>>, %arg5: memref<8x1xi32, #tpu.memory_space<vmem>>, %arg6: memref<1x32xf32, #tpu.memory_space<vmem>>) attributes {dimension_semantics = [], scalar_prefetch = 0 : i64, scratch_operands = 0 : i64, tpu.core_type = #tpu.core_type<tc>} {
    %c0 = arith.constant 0 : index
    %c0_0 = arith.constant 0 : index
    %0 = vector.load %arg0[%c0, %c0_0] : memref<1x32xf32, #tpu.memory_space<vmem>>, vector<1x32xf32>
    %c0_1 = arith.constant 0 : index
    %c0_2 = arith.constant 0 : index
    %1 = vector.load %arg1[%c0_1, %c0_2] : memref<16x32xf32, #tpu.memory_space<vmem>>, vector<16x32xf32>
    %c0_3 = arith.constant 0 : index
    %c0_4 = arith.constant 0 : index
    %2 = vector.load %arg2[%c0_3, %c0_4] : memref<1x128xf32, #tpu.memory_space<vmem>>, vector<1x128xf32>
    %c0_5 = arith.constant 0 : index
    %c0_6 = arith.constant 0 : index
    %3 = vector.load %arg3[%c0_5, %c0_6] : memref<32x128xf32, #tpu.memory_space<vmem>>, vector<32x128xf32>
    %c0_7 = arith.constant 0 : index
    %c0_8 = arith.constant 0 : index
    %4 = vector.load %arg4[%c0_7, %c0_8] : memref<8x1xi32, #tpu.memory_space<vmem>>, vector<8x1xi32>
    %c0_9 = arith.constant 0 : index
    %c0_10 = arith.constant 0 : index
    %5 = vector.load %arg5[%c0_9, %c0_10] : memref<8x1xi32, #tpu.memory_space<vmem>>, vector<8x1xi32>
    %6 = tpu.iota {dimensions = array<i32: 1>} : vector<8x16xi32>
    %7 = vector.broadcast %5 : vector<8x1xi32> to vector<8x16xi32>
    %8 = arith.cmpi eq, %6, %7 : vector<8x16xi32>
    %9 = arith.extui %8 : vector<8x16xi1> to vector<8x16xi32>
    %10 = arith.sitofp %9 : vector<8x16xi32> to vector<8x16xf32>
    %cst = arith.constant dense<0.000000e+00> : vector<8x32xf32>
    %11 = tpu.matmul %10, %1, %cst {dimension_numbers = #tpu.dot_dimension_numbers<[1], [0], [0], [1], [0, 0, 1, 1], [], []>} : vector<8x16xf32>, vector<16x32xf32>, vector<8x32xf32> -> vector<8x32xf32>
    %cst_11 = arith.constant dense<0.000000e+00> : vector<1x128xf32>
    %12 = tpu.matmul %0, %3, %cst_11 {dimension_numbers = #tpu.dot_dimension_numbers<[1], [0], [0], [1], [0, 0, 1, 1], [], []>} : vector<1x32xf32>, vector<32x128xf32>, vector<1x128xf32> -> vector<1x128xf32>
    %cst_12 = arith.constant dense<0.000000e+00> : vector<8x128xf32>
    %13 = tpu.matmul %11, %3, %cst_12 {dimension_numbers = #tpu.dot_dimension_numbers<[1], [0], [0], [1], [0, 0, 1, 1], [], []>} : vector<8x32xf32>, vector<32x128xf32>, vector<8x128xf32> -> vector<8x128xf32>
    %14 = vector.broadcast %2 : vector<1x128xf32> to vector<8x128xf32>
    %15 = arith.addf %13, %14 : vector<8x128xf32>
    %16 = math.tanh %15 : vector<8x128xf32>
    %17 = tpu.iota {dimensions = array<i32: 1>} : vector<8x128xi32>
    %c32_i32 = arith.constant 32 : i32
    %18 = vector.broadcast %c32_i32 : i32 to vector<8x1xi32>
    %19 = arith.muli %4, %18 : vector<8x1xi32>
    %20 = vector.broadcast %19 : vector<8x1xi32> to vector<8x128xi32>
    %21 = arith.cmpi sge, %17, %20 : vector<8x128xi32>
    %c32_i32_13 = arith.constant 32 : i32
    %22 = vector.broadcast %c32_i32_13 : i32 to vector<8x1xi32>
    %23 = arith.addi %19, %22 : vector<8x1xi32>
    %24 = vector.broadcast %23 : vector<8x1xi32> to vector<8x128xi32>
    %25 = arith.cmpi slt, %17, %24 : vector<8x128xi32>
    %26 = arith.andi %21, %25 : vector<8x128xi1>
    %27 = vector.broadcast %12 : vector<1x128xf32> to vector<8x128xf32>
    %28 = arith.mulf %27, %16 : vector<8x128xf32>
    %cst_14 = arith.constant 0.000000e+00 : f32
    %29 = vector.broadcast %cst_14 : f32 to vector<8x128xf32>
    %30 = arith.select %26, %28, %29 : vector<8x128xi1>, vector<8x128xf32>
    %cst_15 = arith.constant dense<0.000000e+00> : vector<8xf32>
    %31 = vector.multi_reduction <add>, %30, %cst_15 [1] : vector<8x128xf32> to vector<8xf32>
    %32 = vector.shape_cast %31 : vector<8xf32> to vector<8x1xf32>
    %cst_16 = arith.constant dense<0xFF800000> : vector<1xf32>
    %33 = vector.multi_reduction <maximumf>, %32, %cst_16 [0] : vector<8x1xf32> to vector<1xf32>
    %34 = vector.shape_cast %33 : vector<1xf32> to vector<1x1xf32>
    %35 = vector.broadcast %34 : vector<1x1xf32> to vector<8x1xf32>
    %36 = arith.subf %32, %35 : vector<8x1xf32>
    %37 = math.exp %36 : vector<8x1xf32>
    %cst_17 = arith.constant dense<0.000000e+00> : vector<1xf32>
    %38 = vector.multi_reduction <add>, %37, %cst_17 [0] : vector<8x1xf32> to vector<1xf32>
    %39 = vector.shape_cast %38 : vector<1xf32> to vector<1x1xf32>
    %40 = vector.broadcast %37 : vector<8x1xf32> to vector<8x32xf32>
    %41 = arith.mulf %11, %40 : vector<8x32xf32>
    %cst_18 = arith.constant dense<0.000000e+00> : vector<32xf32>
    %42 = vector.multi_reduction <add>, %41, %cst_18 [0] : vector<8x32xf32> to vector<32xf32>
    %43 = vector.shape_cast %42 : vector<32xf32> to vector<1x32xf32>
    %44 = tpu.reciprocal %39 : vector<1x1xf32> -> vector<1x1xf32>
    %45 = vector.broadcast %44 : vector<1x1xf32> to vector<1x32xf32>
    %46 = arith.mulf %43, %45 : vector<1x32xf32>
    %c0_19 = arith.constant 0 : index
    %c0_20 = arith.constant 0 : index
    %47 = vector.load %arg6[%c0_19, %c0_20] : memref<1x32xf32, #tpu.memory_space<vmem>>, vector<1x32xf32>
    tpu.vector_store %arg6[%c0_19, %c0_20], %46 {strides = array<i32>} : memref<1x32xf32, #tpu.memory_space<vmem>>, vector<1x32xf32>,
    return
  }
}

</mosaic_0001>

<llo_original>
// kernel: tpu_custom_call.1
$region0: #{tpu_custom_call.1}
  #allocation0 [shape = 'u32[]', space=smem, size = 0x4, offset = 0x4, fixed_abs, tag = 'smem constant byte address 0x4 - core index']
  #allocation1 [shape = 'u32[72,128]{1,0:T(1,128)}', space=vmem, size = 0x9000, scoped, tag = 'internal scratch']
  %s0 = inlined_call_operand.vmem [shape: f32[1,32], index: 0, kind: input, shape index: {}]
  %s1 = inlined_call_operand.vmem [shape: f32[16,32], index: 1, kind: input, shape index: {}]
  %s2 = inlined_call_operand.hbm [shape: f32[1,128], index: 2, kind: input, shape index: {}]
  %s3 = inlined_call_operand.hbm [shape: f32[32,128], index: 3, kind: input, shape index: {}]
  %s4 = inlined_call_operand.vmem [shape: s32[8,1], index: 4, kind: input, shape index: {}]
  %s5 = inlined_call_operand.vmem [shape: s32[8,1], index: 5, kind: input, shape index: {}]
  %s6 = inlined_call_operand.hbm [shape: f32[1,32], index: 6, kind: output, shape index: {}]
  %s7 = sld [smem:[#allocation0]]
  $region42: #{tpu_custom_call.1} parent=0
    _
  %s9 = ssub.s32 1, %s7
  %s10 = scalar_select 0, %s9, %s7
  $region1: #{tpu_custom_call.1} parent=0
    #allocation2 [shape = 'u8[512]{0}', space=vmem, size = 0x400, scoped, tag = 'input window, operand 2, single buffered']
    #allocation3 [shape = 's32[1]{0}', space=sflag, size = 0x4, scoped, tag = 'scoped memory for tpu_custom_call.1']
    #allocation4 [shape = 's32[1]{0}', space=sflag, size = 0x4, scoped, tag = 'scoped memory for tpu_custom_call.1']
    #allocation5 [shape = 'u8[16384]{0}', space=vmem, size = 0x4000, scoped, tag = 'input window, operand 3, single buffered']
    #allocation6 [shape = 's32[1]{0}', space=sflag, size = 0x4, scoped, tag = 'scoped memory for tpu_custom_call.1']
    #allocation7 [shape = 'u8[512]{0}', space=vmem, size = 0x400, scoped, tag = 'output window, operand 0, single buffered']
    %11 = vsyncpa [#allocation3], 0
    %12 = vsyncpa [#allocation6], 0
    %13 = vsyncpa [#allocation4], 0
    // Predicated region
    $region2: #{tpu_custom_call.1} parent=1 // pred_check
      _
    $region3: #{tpu_custom_call.1} parent=1 // pred_check_branch
      %15 = sbr.rel (0) target = $region5
    $region4: #{tpu_custom_call.1} parent=1 // pred_region
      _
    $region5: #{tpu_custom_call.1} parent=1 // pred_fallthru
      _
    // Predicated region
    $region6: #{tpu_custom_call.1} parent=1 // pred_check
      _
    $region7: #{tpu_custom_call.1} parent=1 // pred_check_branch
      %17 = sbr.rel (0) target = $region9
    $region8: #{tpu_custom_call.1} parent=1 // pred_region
      _
    $region9: #{tpu_custom_call.1} parent=1 // pred_fallthru
      _
    // Predicated region
    $region10: #{tpu_custom_call.1} parent=1 // pred_check
      _
    $region11: #{tpu_custom_call.1} parent=1 // pred_check_branch
      %19 = sbr.rel (0) target = $region13
    $region12: #{tpu_custom_call.1} parent=1 // pred_region
      %21 = vsyncadd [#allocation3], 0
      %s23 = sshll.u32 %s2, 4
      %s24 = int_to_ptr.hbm [resolvable:$true] %s23
      %s25 = sshll.u32 [#allocation2], 4
      %s26 = int_to_ptr.vmem [resolvable:$true] %s25
      %28 = dma.hbm_to_vmem [thread:$0]  %s24, 16, %s26, [#allocation3]
    $region13: #{tpu_custom_call.1} parent=1 // pred_fallthru
      _
    // Predicated region
    $region14: #{tpu_custom_call.1} parent=1 // pred_check
      _
    $region15: #{tpu_custom_call.1} parent=1 // pred_check_branch
      %30 = sbr.rel (0) target = $region17
    $region16: #{tpu_custom_call.1} parent=1 // pred_region
      %32 = vsyncadd [#allocation6], 0
      %s33 = sshll.u32 %s3, 4
      %s34 = int_to_ptr.hbm [resolvable:$true] %s33
      %s35 = sshll.u32 [#allocation5], 4
      %s36 = int_to_ptr.vmem [resolvable:$true] %s35
      %41 = dma.hbm_to_vmem [thread:$0]  %s34, 512, %s36, [#allocation6], 128, 128, 8
    $region17: #{tpu_custom_call.1} parent=1 // pred_fallthru
      _
    // Predicated region
    $region18: #{tpu_custom_call.1} parent=1 // pred_check
      _
    $region19: #{tpu_custom_call.1} parent=1 // pred_check_branch
      %43 = sbr.rel (0) target = $region21
    $region20: #{tpu_custom_call.1} parent=1 // pred_region
      _
    $region21: #{tpu_custom_call.1} parent=1 // pred_fallthru
      _
    // Predicated region
    $region22: #{tpu_custom_call.1} parent=1 // pred_check
      _
    $region23: #{tpu_custom_call.1} parent=1 // pred_check_branch
      %45 = sbr.rel (0) target = $region25
    $region24: #{tpu_custom_call.1} parent=1 // pred_region
      _
    $region25: #{tpu_custom_call.1} parent=1 // pred_fallthru
      _
    // Predicated region
    $region26: #{tpu_custom_call.1} parent=1 // pred_check
      _
    $region27: #{tpu_custom_call.1} parent=1 // pred_check_branch
      %47 = sbr.rel (0) target = $region29
    $region28: #{tpu_custom_call.1} parent=1 // pred_region
      %49 = dma.done [#allocation3], 16
    $region29: #{tpu_custom_call.1} parent=1 // pred_fallthru
      _
    // Predicated region
    $region30: #{tpu_custom_call.1} parent=1 // pred_check
      _
    $region31: #{tpu_custom_call.1} parent=1 // pred_check_branch
      %51 = sbr.rel (0) target = $region33
    $region32: #{tpu_custom_call.1} parent=1 // pred_region
      %53 = dma.done [#allocation6], 512
    $region33: #{tpu_custom_call.1} parent=1 // pred_fallthru
      _
    %v54 = vld [vmem:[%s0] sm:$0x1]
    %v55 = vld [vmem:[%s1] sm:$0xff]
    %v56 = vld [vmem:[%s1 + $0x8] sm:$0xff]
    %v57 = vld [vmem:[#allocation2] sm:$0x1]
    %v58 = vld [vmem:[#allocation5] sm:$0xff]
    %v59 = vld [vmem:[#allocation5 + $0x8] sm:$0xff]
    %v60 = vld [vmem:[#allocation5 + $0x10] sm:$0xff]
    %v61 = vld [vmem:[#allocation5 + $0x18] sm:$0xff]
    %v62 = vld [vmem:[%s4] sm:$0xff]
    %v63 = vld [vmem:[%s5] sm:$0xff]
    %v64 = vlaneseq
    %v65 = vand.u32 %v64, 127
    %66 = vset.pattern.permute.xlu0 0
    %67 = vperm.xlu0 %66, %v63
    %v68 = vpop.permute.xlu0 %67
    %vm69 = vcmp.eq.s32.totalorder %v65, %v68
    %v70 = vsel %vm69, 1, 0
    %v71 = vcvt.s32.f32 %v70
    %vm72 = vcmask 130048
    %v74 = vsel %vm72, %v71, 0
    %76 = vmatpush.msra.mxu0 0.0
    %77 = vmatpush.msra.mxu0 0.0
    %78 = vmatpush.msra.mxu0 0.0
    %79 = vmatpush.msra.mxu0 0.0
    %80 = vmatpush.msra.mxu0 0.0
    %81 = vmatpush.msra.mxu0 0.0
    %82 = vmatpush.msra.mxu0 0.0
    %83 = vmatpush.msra.mxu0 0.0
    %84 = vmatpush.msra.mxu0 0.0
    %85 = vmatpush.msra.mxu0 0.0
    %86 = vmatpush.msra.mxu0 0.0
    %87 = vmatpush.msra.mxu0 0.0
    %88 = vmatpush.msra.mxu0 0.0
    %89 = vmatpush.msra.mxu0 0.0
    %90 = vmatpush.msra.mxu0 %v56
    %91 = vmatpush.msra.mxu0 %v55
    %92 = vmatmul.f32.gmra.mxu0 %v74
    %v93 = vpop.f32.mrf.mxu0
    %v94 = vadd.f32 0.0, %v93
    %95 = vdwg.mxu0
    %vm96 = vcmask 261120
    %v98 = vsel %vm96, %v54, 0
    %100 = vmatpush.msra.mxu0 0.0
    %101 = vmatpush.msra.mxu0 0.0
    %102 = vmatpush.msra.mxu0 0.0
    %103 = vmatpush.msra.mxu0 0.0
    %104 = vmatpush.msra.mxu0 0.0
    %105 = vmatpush.msra.mxu0 0.0
    %106 = vmatpush.msra.mxu0 0.0
    %107 = vmatpush.msra.mxu0 0.0
    %108 = vmatpush.msra.mxu0 0.0
    %109 = vmatpush.msra.mxu0 0.0
    %110 = vmatpush.msra.mxu0 0.0
    %111 = vmatpush.msra.mxu0 0.0
    %112 = vmatpush.msra.mxu0 %v61
    %113 = vmatpush.msra.mxu0 %v60
    %114 = vmatpush.msra.mxu0 %v59
    %115 = vmatpush.msra.mxu0 %v58
    %116 = vmatmul.f32.gmra.mxu0 %v98
    %v117 = vpop.f32.mrf.mxu0
    %v118 = vadd.f32 0.0, %v117
    %119 = vdwg.mxu0
    %v121 = vperm.slane %v57, 0
    %v124 = vsel %vm96, %v94, 0
    %126 = vmatpush.msra.mxu0 0.0
    %127 = vmatpush.msra.mxu0 0.0
    %128 = vmatpush.msra.mxu0 0.0
    %129 = vmatpush.msra.mxu0 0.0
    %130 = vmatpush.msra.mxu0 0.0
    %131 = vmatpush.msra.mxu0 0.0
    %132 = vmatpush.msra.mxu0 0.0
    %133 = vmatpush.msra.mxu0 0.0
    %134 = vmatpush.msra.mxu0 0.0
    %135 = vmatpush.msra.mxu0 0.0
    %136 = vmatpush.msra.mxu0 0.0
    %137 = vmatpush.msra.mxu0 0.0
    %138 = vmatpush.msra.mxu0 %v61
    %139 = vmatpush.msra.mxu0 %v60
    %140 = vmatpush.msra.mxu0 %v59
    %141 = vmatpush.msra.mxu0 %v58
    %142 = vmatmul.f32.gmra.mxu0 %v124
    %v143 = vpop.f32.mrf.mxu0
    %v144 = vadd.f32 %v121, %v143
    %145 = vdwg.mxu0
    %v146 = vtanh.pop %v144
    %v147 = vmul.u32 %v62, 32
    %148 = vset.pattern.permute.xlu0 0
    %149 = vperm.xlu0 %148, %v147
    %v150 = vpop.permute.xlu0 %149
    %vm151 = vcmp.ge.s32.totalorder %v65, %v150
    %v152 = vadd.s32 %v147, 32
    %153 = vset.pattern.permute.xlu0 0
    %154 = vperm.xlu0 %153, %v152
    %v155 = vpop.permute.xlu0 %154
    %vm156 = vcmp.lt.s32.totalorder %v65, %v155
    %vm157 = vmand %vm151, %vm156
    %v158 = vperm.slane %v118, 0
    %v159 = vmul.f32 %v158, %v146
    %v160 = vsel %vm157, %v159, 0.0
    %161 = vadd.xlane.f32.xlu0 %v160
    %v162 = vpop.xlane.xlu0 %161
    %v163 = vrot.slane %v162, 4
    %v164 = vmax.f32 %v162, %v163
    %v165 = vrot.slane %v164, 2
    %v166 = vmax.f32 %v164, %v165
    %v167 = vrot.slane %v166, 1
    %v168 = vmax.f32 %v166, %v167
    %v169 = vsub.f32 %v162, %v168
    %v170 = vmul.f32 %v169, 1.442695
    %v171 = vpow.pop %v170
    %v172 = vrot.slane %v171, 4
    %v173 = vadd.f32 %v171, %v172
    %v174 = vrot.slane %v173, 2
    %v175 = vadd.f32 %v173, %v174
    %v176 = vrot.slane %v175, 1
    %v177 = vadd.f32 %v175, %v176
    %v178 = vmul.f32 %v94, %v171
    %v179 = vsel %vm96, %v178, 0.0
    %v180 = vrot.slane %v179, 4
    %v181 = vadd.f32 %v179, %v180
    %v182 = vrot.slane %v181, 2
    %v183 = vadd.f32 %v181, %v182
    %v184 = vrot.slane %v183, 1
    %v185 = vadd.f32 %v183, %v184
    %v186 = vrcp.pop %v177
    %v187 = vmul.f32 %v177, %v186
    %v188 = vsub.f32 1.0, %v187
    %v189 = vmul.f32 %v186, %v188
    %v190 = vadd.f32 %v186, %v189
    %vm191 = vweird.f32 %v177
    %vm192 = vweird.f32 %v186
    %vm193 = vmor %vm191, %vm192
    %v194 = vsel %vm193, %v186, %v190
    %v195 = vand.u32 2147483647, %v177
    %vm196 = vcmp.eq.f32.partialorder %v195, 8.507059e+37
    %v197 = vand.u32 %v177, 2147483648
    %v198 = vor.u32 1.1754944e-38, %v197
    %v199 = vsel %vm196, %v198, %v194
    %v200 = vmul.f32 %v185, %v199
    %vm201 = vcmask 253952
    %202 = vst.msk [vmem:[#allocation7] sm:$0x1] %vm201, %v200
    // Predicated region
    $region34: #{tpu_custom_call.1} parent=1 // pred_check
      _
    $region35: #{tpu_custom_call.1} parent=1 // pred_check_branch
      %204 = sbr.rel (0) target = $region37
    $region36: #{tpu_custom_call.1} parent=1 // pred_region
      %206 = vsyncadd [#allocation4], 0
      %s208 = sshll.u32 [#allocation7], 4
      %s209 = int_to_ptr.vmem [resolvable:$true] %s208
      %s210 = sshll.u32 %s6, 4
      %s211 = int_to_ptr.hbm [resolvable:$true] %s210
      %213 = dma.vmem_to_hbm [thread:$0]  %s209, 16, %s211, [#allocation4]
    $region37: #{tpu_custom_call.1} parent=1 // pred_fallthru
      _
    // Predicated region
    $region38: #{tpu_custom_call.1} parent=1 // pred_check
      _
    $region39: #{tpu_custom_call.1} parent=1 // pred_check_branch
      %215 = sbr.rel (0) target = $region41
    $region40: #{tpu_custom_call.1} parent=1 // pred_region
      %217 = dma.done [#allocation4], 16
    $region41: #{tpu_custom_call.1} parent=1 // pred_fallthru
      _
    %218 = vsyncpa [#allocation3], 1
    %219 = vsyncpa [#allocation6], 1
    %220 = vsyncpa [#allocation4], 1

</llo_original>
